<compile_context>
chip_gen: v7x
topology: tpu7x:2x2x1
jax: 0.10.0
libtpu: 0.0.40
codegen_flags: <defaults>
</compile_context>

<pallas_src>
import functools

import jax
import jax.numpy as jnp
from jax.experimental import pallas as pl
from jax.experimental.pallas import tpu as pltpu


_VMEM = pl.BlockSpec(memory_space=pltpu.MemorySpace.VMEM)


# ----------------------------------------------------------------------------
# Fused Pallas kernel: all layers + pooling + head in one pass.
# ----------------------------------------------------------------------------

def _make_fused_gcn_kernel(num_layers):
  n_hidden = num_layers - 1

  def kernel(adj_ref, x_ref, *args):
    # args layout:
    #   [w_0, scale_0, shift_0, ..., w_{L-2}, scale_{L-2}, shift_{L-2},
    #    w_last, b_last, mask, lin_w, lin_b, out_ref]
    hidden_args = args[:3 * n_hidden]
    (w_last_ref, b_last_ref, mask_ref, wl_ref, bl_ref,
     out_ref) = args[3 * n_hidden:]

    a = adj_ref[...]                # (N, N) normalized adjacency, VMEM-resident
    cur = x_ref[...]                # (N, F) node features

    # Hidden layers: relu(BN(A_hat @ (X @ W))).  Conv bias is pre-folded into
    # the BN shift on the host, so no separate bias add here.
    for i in range(n_hidden):       # static (unrolled) loop over layers
      w = hidden_args[3 * i][...]           # (F_in, H)
      scale = hidden_args[3 * i + 1][...]   # (1, H)
      shift = hidden_args[3 * i + 2][...]   # (1, H), includes conv bias
      xw = jnp.dot(cur, w, preferred_element_type=jnp.float32)
      h = jnp.dot(a, xw, preferred_element_type=jnp.float32)
      cur = jnp.maximum(h * scale + shift, jnp.float32(0.0))

    # Last GCN conv (no BN / relu): A_hat @ (X @ W) + b.
    xw = jnp.dot(cur, w_last_ref[...], preferred_element_type=jnp.float32)
    h = jnp.dot(a, xw, preferred_element_type=jnp.float32) + b_last_ref[...]

    # global_max_pool: one broadcasted additive-mask reduction over nodes.
    mask = mask_ref[...]                                      # (G, N) one-hot
    neg_bias = (mask - jnp.float32(1.0)) * jnp.float32(1e30)  # 0 or -1e30
    masked = h[None, :, :] + neg_bias[:, :, None]             # (G, N, H)
    pooled = jnp.max(masked, axis=1)                          # (G, H)

    # Linear head + log_softmax.
    logits = jnp.dot(pooled, wl_ref[...], preferred_element_type=jnp.float32)
    logits = logits + bl_ref[...]                             # (G, C)
    m = jnp.max(logits, axis=-1, keepdims=True)
    z = logits - m
    lse = jnp.log(jnp.sum(jnp.exp(z), axis=-1, keepdims=True))
    out_ref[...] = z - lse

  return kernel


def gcn_forward(params, x, adj, batch_mask, num_layers):
  """Single fused pallas_call for the whole forward pass."""
  n_hidden = num_layers - 1
  inputs = [adj, x]
  for i in range(n_hidden):
    inputs += [params["conv_w"][i], params["bn_scale"][i],
               params["bn_shift_fused"][i]]
  inputs += [params["conv_w"][num_layers - 1], params["conv_b_last"],
             batch_mask, params["lin_w"], params["lin_b"]]

  g = batch_mask.shape[0]
  c = params["lin_w"].shape[1]
  kernel = _make_fused_gcn_kernel(num_layers)
  return pl.pallas_call(
      kernel,
      out_shape=jax.ShapeDtypeStruct((g, c), jnp.float32),
      in_specs=[_VMEM] * len(inputs),
      out_specs=_VMEM,
  )(*inputs)


# ----------------------------------------------------------------------------
# Plain-JAX glue: adjacency normalization (GCNConv-style: add self loops,
# symmetric D^{-1/2} (A + I) D^{-1/2}) and parameter construction.
# ----------------------------------------------------------------------------

def build_norm_adj(edge_index, num_nodes):
  src, dst = edge_index[0], edge_index[1]
  adj = jnp.zeros((num_nodes, num_nodes), jnp.float32)
  adj = adj.at[dst, src].set(1.0)                      # message flows src->dst
  adj = adj + jnp.eye(num_nodes, dtype=jnp.float32)    # self loops
  deg = jnp.sum(adj, axis=1)
  d_inv_sqrt = 1.0 / jnp.sqrt(jnp.clip(deg, 1.0))
  return adj * d_inv_sqrt[:, None] * d_inv_sqrt[None, :]


def init_params(key, num_features, hidden_dim, num_classes, num_layers):
  """Build conv / BN / linear params; fold hidden conv bias into BN shift."""
  eps = 1e-5
  dims = [num_features] + [hidden_dim] * num_layers
  conv_w, conv_b = [], []
  for i in range(num_layers):
    key, k_w = jax.random.split(key)
    w = jax.random.normal(k_w, (dims[i], dims[i + 1]), jnp.float32) * 0.1
    conv_w.append(w)
    conv_b.append(jnp.zeros((1, dims[i + 1]), jnp.float32))

  bn_scale, bn_shift_fused = [], []
  for i in range(num_layers - 1):
    key, k_g, k_b, k_m, k_v = jax.random.split(key, 5)
    gamma = 1.0 + 0.05 * jax.random.normal(k_g, (1, hidden_dim), jnp.float32)
    beta = 0.05 * jax.random.normal(k_b, (1, hidden_dim), jnp.float32)
    run_mean = 0.05 * jax.random.normal(k_m, (1, hidden_dim), jnp.float32)
    run_var = 1.0 + 0.05 * jnp.abs(
        jax.random.normal(k_v, (1, hidden_dim), jnp.float32))
    scale = gamma / jnp.sqrt(run_var + eps)
    shift = beta - run_mean * scale
    # Fold the conv bias of hidden layer i into the BN shift:
    #   (h + b) * scale + shift == h * scale + (shift + b * scale)
    bn_scale.append(scale)
    bn_shift_fused.append(shift + conv_b[i] * scale)

  key, k_l = jax.random.split(key)
  lin_w = jax.random.normal(
      k_l, (hidden_dim, num_classes), jnp.float32) * 0.1
  lin_b = jnp.zeros((1, num_classes), jnp.float32)

  return {
      "conv_w": conv_w,
      "conv_b_last": conv_b[num_layers - 1],
      "bn_scale": bn_scale,
      "bn_shift_fused": bn_shift_fused,
      "lin_w": lin_w,
      "lin_b": lin_b,
  }


# ----------------------------------------------------------------------------
# Main
# ----------------------------------------------------------------------------

if __name__ == "__main__":
  # Model config (args dict of the PyTorch module).
  num_layers = 3
  num_features = 16
  hidden_dim = 32
  num_classes = 4

  # Graph data: 2 graphs, 16 nodes each (32 nodes total), ring topology.
  num_graphs = 2
  nodes_per_graph = 16
  num_nodes = num_graphs * nodes_per_graph

  key = jax.random.PRNGKey(0)
  key, k_x = jax.random.split(key)
  x = jax.random.normal(k_x, (num_nodes, num_features), jnp.float32)

  # Undirected ring edges within each graph.
  src_list, dst_list = [], []
  for g in range(num_graphs):
    base = g * nodes_per_graph
    for i in range(nodes_per_graph):
      a = base + i
      b = base + (i + 1) % nodes_per_graph
      src_list += [a, b]
      dst_list += [b, a]
  edge_index = jnp.array([src_list, dst_list], dtype=jnp.int32)

  batch = jnp.repeat(jnp.arange(num_graphs, dtype=jnp.int32), nodes_per_graph)
  # One-hot graph membership mask (G, N) used by the pooling reduction.
  batch_mask = (batch[None, :] == jnp.arange(num_graphs)[:, None]).astype(
      jnp.float32)

  adj = build_norm_adj(edge_index, num_nodes)
  params = init_params(key, num_features, hidden_dim, num_classes, num_layers)

  fwd = jax.jit(functools.partial(gcn_forward, num_layers=num_layers))
  out = fwd(params, x, adj, batch_mask)
  out = jax.block_until_ready(out)

  assert out.shape == (num_graphs, num_classes)
  assert bool(jnp.all(jnp.isfinite(out)))
  # log_softmax rows should exponentiate-sum to ~1.
  assert bool(jnp.allclose(jnp.sum(jnp.exp(out), axis=-1), 1.0, atol=1e-4))

  print("KERNEL_OK")
</pallas_src>

<mosaic_0001>
module attributes {stable_mosaic.version = 11 : i64} {
  func.func @kernel(%arg0: memref<32x32xf32, #tpu.memory_space<vmem>>, %arg1: memref<32x16xf32, #tpu.memory_space<vmem>>, %arg2: memref<16x32xf32, #tpu.memory_space<vmem>>, %arg3: memref<1x32xf32, #tpu.memory_space<vmem>>, %arg4: memref<1x32xf32, #tpu.memory_space<vmem>>, %arg5: memref<32x32xf32, #tpu.memory_space<vmem>>, %arg6: memref<1x32xf32, #tpu.memory_space<vmem>>, %arg7: memref<1x32xf32, #tpu.memory_space<vmem>>, %arg8: memref<32x32xf32, #tpu.memory_space<vmem>>, %arg9: memref<1x32xf32, #tpu.memory_space<vmem>>, %arg10: memref<2x32xf32, #tpu.memory_space<vmem>>, %arg11: memref<32x4xf32, #tpu.memory_space<vmem>>, %arg12: memref<1x4xf32, #tpu.memory_space<vmem>>, %arg13: memref<2x4xf32, #tpu.memory_space<vmem>>) attributes {dimension_semantics = [], scalar_prefetch = 0 : i64, scratch_operands = 0 : i64, tpu.core_type = #tpu.core_type<tc>} {
    %c0 = arith.constant 0 : index
    %c0_0 = arith.constant 0 : index
    %0 = vector.load %arg0[%c0, %c0_0] : memref<32x32xf32, #tpu.memory_space<vmem>>, vector<32x32xf32>
    %c0_1 = arith.constant 0 : index
    %c0_2 = arith.constant 0 : index
    %1 = vector.load %arg1[%c0_1, %c0_2] : memref<32x16xf32, #tpu.memory_space<vmem>>, vector<32x16xf32>
    %c0_3 = arith.constant 0 : index
    %c0_4 = arith.constant 0 : index
    %2 = vector.load %arg2[%c0_3, %c0_4] : memref<16x32xf32, #tpu.memory_space<vmem>>, vector<16x32xf32>
    %c0_5 = arith.constant 0 : index
    %c0_6 = arith.constant 0 : index
    %3 = vector.load %arg3[%c0_5, %c0_6] : memref<1x32xf32, #tpu.memory_space<vmem>>, vector<1x32xf32>
    %c0_7 = arith.constant 0 : index
    %c0_8 = arith.constant 0 : index
    %4 = vector.load %arg4[%c0_7, %c0_8] : memref<1x32xf32, #tpu.memory_space<vmem>>, vector<1x32xf32>
    %cst = arith.constant dense<0.000000e+00> : vector<32x32xf32>
    %5 = tpu.matmul %1, %2, %cst {dimension_numbers = #tpu.dot_dimension_numbers<[1], [0], [0], [1], [0, 0, 1, 1], [], []>} : vector<32x16xf32>, vector<16x32xf32>, vector<32x32xf32> -> vector<32x32xf32>
    %cst_9 = arith.constant dense<0.000000e+00> : vector<32x32xf32>
    %6 = tpu.matmul %0, %5, %cst_9 {dimension_numbers = #tpu.dot_dimension_numbers<[1], [0], [0], [1], [0, 0, 1, 1], [], []>} : vector<32x32xf32>, vector<32x32xf32>, vector<32x32xf32> -> vector<32x32xf32>
    %7 = vector.broadcast %3 : vector<1x32xf32> to vector<32x32xf32>
    %8 = arith.mulf %6, %7 : vector<32x32xf32>
    %9 = vector.broadcast %4 : vector<1x32xf32> to vector<32x32xf32>
    %10 = arith.addf %8, %9 : vector<32x32xf32>
    %cst_10 = arith.constant 0.000000e+00 : f32
    %11 = vector.broadcast %cst_10 : f32 to vector<32x32xf32>
    %12 = arith.maximumf %10, %11 : vector<32x32xf32>
    %c0_11 = arith.constant 0 : index
    %c0_12 = arith.constant 0 : index
    %13 = vector.load %arg5[%c0_11, %c0_12] : memref<32x32xf32, #tpu.memory_space<vmem>>, vector<32x32xf32>
    %c0_13 = arith.constant 0 : index
    %c0_14 = arith.constant 0 : index
    %14 = vector.load %arg6[%c0_13, %c0_14] : memref<1x32xf32, #tpu.memory_space<vmem>>, vector<1x32xf32>
    %c0_15 = arith.constant 0 : index
    %c0_16 = arith.constant 0 : index
    %15 = vector.load %arg7[%c0_15, %c0_16] : memref<1x32xf32, #tpu.memory_space<vmem>>, vector<1x32xf32>
    %cst_17 = arith.constant dense<0.000000e+00> : vector<32x32xf32>
    %16 = tpu.matmul %12, %13, %cst_17 {dimension_numbers = #tpu.dot_dimension_numbers<[1], [0], [0], [1], [0, 0, 1, 1], [], []>} : vector<32x32xf32>, vector<32x32xf32>, vector<32x32xf32> -> vector<32x32xf32>
    %cst_18 = arith.constant dense<0.000000e+00> : vector<32x32xf32>
    %17 = tpu.matmul %0, %16, %cst_18 {dimension_numbers = #tpu.dot_dimension_numbers<[1], [0], [0], [1], [0, 0, 1, 1], [], []>} : vector<32x32xf32>, vector<32x32xf32>, vector<32x32xf32> -> vector<32x32xf32>
    %18 = vector.broadcast %14 : vector<1x32xf32> to vector<32x32xf32>
    %19 = arith.mulf %17, %18 : vector<32x32xf32>
    %20 = vector.broadcast %15 : vector<1x32xf32> to vector<32x32xf32>
    %21 = arith.addf %19, %20 : vector<32x32xf32>
    %cst_19 = arith.constant 0.000000e+00 : f32
    %22 = vector.broadcast %cst_19 : f32 to vector<32x32xf32>
    %23 = arith.maximumf %21, %22 : vector<32x32xf32>
    %c0_20 = arith.constant 0 : index
    %c0_21 = arith.constant 0 : index
    %24 = vector.load %arg8[%c0_20, %c0_21] : memref<32x32xf32, #tpu.memory_space<vmem>>, vector<32x32xf32>
    %cst_22 = arith.constant dense<0.000000e+00> : vector<32x32xf32>
    %25 = tpu.matmul %23, %24, %cst_22 {dimension_numbers = #tpu.dot_dimension_numbers<[1], [0], [0], [1], [0, 0, 1, 1], [], []>} : vector<32x32xf32>, vector<32x32xf32>, vector<32x32xf32> -> vector<32x32xf32>
    %cst_23 = arith.constant dense<0.000000e+00> : vector<32x32xf32>
    %26 = tpu.matmul %0, %25, %cst_23 {dimension_numbers = #tpu.dot_dimension_numbers<[1], [0], [0], [1], [0, 0, 1, 1], [], []>} : vector<32x32xf32>, vector<32x32xf32>, vector<32x32xf32> -> vector<32x32xf32>
    %c0_24 = arith.constant 0 : index
    %c0_25 = arith.constant 0 : index
    %27 = vector.load %arg9[%c0_24, %c0_25] : memref<1x32xf32, #tpu.memory_space<vmem>>, vector<1x32xf32>
    %28 = vector.broadcast %27 : vector<1x32xf32> to vector<32x32xf32>
    %29 = arith.addf %26, %28 : vector<32x32xf32>
    %c0_26 = arith.constant 0 : index
    %c0_27 = arith.constant 0 : index
    %30 = vector.load %arg10[%c0_26, %c0_27] : memref<2x32xf32, #tpu.memory_space<vmem>>, vector<2x32xf32>
    %cst_28 = arith.constant 1.000000e+00 : f32
    %31 = vector.broadcast %cst_28 : f32 to vector<2x32xf32>
    %32 = arith.subf %30, %31 : vector<2x32xf32>
    %cst_29 = arith.constant 1.000000e+30 : f32
    %33 = vector.broadcast %cst_29 : f32 to vector<2x32xf32>
    %34 = arith.mulf %32, %33 : vector<2x32xf32>
    %35 = vector.shape_cast %29 : vector<32x32xf32> to vector<1x32x32xf32>
    %36 = vector.shape_cast %34 : vector<2x32xf32> to vector<2x32x1xf32>
    %37 = vector.broadcast %35 : vector<1x32x32xf32> to vector<2x32x32xf32>
    %38 = vector.broadcast %36 : vector<2x32x1xf32> to vector<2x32x32xf32>
    %39 = arith.addf %37, %38 : vector<2x32x32xf32>
    %cst_30 = arith.constant dense<0xFF800000> : vector<2x32xf32>
    %40 = vector.multi_reduction <maximumf>, %39, %cst_30 [1] : vector<2x32x32xf32> to vector<2x32xf32>
    %c0_31 = arith.constant 0 : index
    %c0_32 = arith.constant 0 : index
    %41 = vector.load %arg11[%c0_31, %c0_32] : memref<32x4xf32, #tpu.memory_space<vmem>>, vector<32x4xf32>
    %cst_33 = arith.constant dense<0.000000e+00> : vector<2x4xf32>
    %42 = tpu.matmul %40, %41, %cst_33 {dimension_numbers = #tpu.dot_dimension_numbers<[1], [0], [0], [1], [0, 0, 1, 1], [], []>} : vector<2x32xf32>, vector<32x4xf32>, vector<2x4xf32> -> vector<2x4xf32>
    %c0_34 = arith.constant 0 : index
    %c0_35 = arith.constant 0 : index
    %43 = vector.load %arg12[%c0_34, %c0_35] : memref<1x4xf32, #tpu.memory_space<vmem>>, vector<1x4xf32>
    %44 = vector.broadcast %43 : vector<1x4xf32> to vector<2x4xf32>
    %45 = arith.addf %42, %44 : vector<2x4xf32>
    %cst_36 = arith.constant dense<0xFF800000> : vector<2xf32>
    %46 = vector.multi_reduction <maximumf>, %45, %cst_36 [1] : vector<2x4xf32> to vector<2xf32>
    %47 = vector.shape_cast %46 : vector<2xf32> to vector<2x1xf32>
    %48 = vector.broadcast %47 : vector<2x1xf32> to vector<2x4xf32>
    %49 = arith.subf %45, %48 : vector<2x4xf32>
    %50 = math.exp %49 : vector<2x4xf32>
    %cst_37 = arith.constant dense<0.000000e+00> : vector<2xf32>
    %51 = vector.multi_reduction <add>, %50, %cst_37 [1] : vector<2x4xf32> to vector<2xf32>
    %52 = vector.shape_cast %51 : vector<2xf32> to vector<2x1xf32>
    %53 = math.log %52 : vector<2x1xf32>
    %54 = vector.broadcast %53 : vector<2x1xf32> to vector<2x4xf32>
    %55 = arith.subf %49, %54 : vector<2x4xf32>
    %c0_38 = arith.constant 0 : index
    %c0_39 = arith.constant 0 : index
    %56 = vector.load %arg13[%c0_38, %c0_39] : memref<2x4xf32, #tpu.memory_space<vmem>>, vector<2x4xf32>
    tpu.vector_store %arg13[%c0_38, %c0_39], %55 {strides = array<i32>} : memref<2x4xf32, #tpu.memory_space<vmem>>, vector<2x4xf32>,
    return
  }
}

</mosaic_0001>

<llo_original>
// kernel: gcn_forward.1
$region0: #{gcn_forward.1}
  #allocation0 [shape = 'u32[]', space=smem, size = 0x4, offset = 0x4, fixed_abs, tag = 'smem constant byte address 0x4 - core index']
  #allocation1 [shape = 'u32[144,128]{1,0:T(1,128)}', space=vmem, size = 0x12000, scoped, tag = 'internal scratch']
  %s0 = inlined_call_operand.vmem [shape: f32[32,32], index: 0, kind: input, shape index: {}]
  %s1 = inlined_call_operand.vmem [shape: f32[32,16], index: 1, kind: input, shape index: {}]
  %s2 = inlined_call_operand.hbm [shape: f32[16,32], index: 2, kind: input, shape index: {}]
  %s3 = inlined_call_operand.hbm [shape: f32[1,32], index: 3, kind: input, shape index: {}]
  %s4 = inlined_call_operand.hbm [shape: f32[1,32], index: 4, kind: input, shape index: {}]
  %s5 = inlined_call_operand.vmem [shape: f32[32,32], index: 5, kind: input, shape index: {}]
  %s6 = inlined_call_operand.hbm [shape: f32[1,32], index: 6, kind: input, shape index: {}]
  %s7 = inlined_call_operand.hbm [shape: f32[1,32], index: 7, kind: input, shape index: {}]
  %s8 = inlined_call_operand.vmem [shape: f32[32,32], index: 8, kind: input, shape index: {}]
  %s9 = inlined_call_operand.hbm [shape: f32[1,32], index: 9, kind: input, shape index: {}]
  %s10 = inlined_call_operand.vmem [shape: f32[2,32], index: 10, kind: input, shape index: {}]
  %s11 = inlined_call_operand.vmem [shape: f32[32,4], index: 11, kind: input, shape index: {}]
  %s12 = inlined_call_operand.hbm [shape: f32[1,4], index: 12, kind: input, shape index: {}]
  %s13 = inlined_call_operand.hbm [shape: f32[2,4], index: 13, kind: output, shape index: {}]
  %s14 = sld [smem:[#allocation0]]
  $region90: #{gcn_forward.1} parent=0
    _
  %s16 = ssub.s32 1, %s14
  %s17 = scalar_select 0, %s16, %s14
  $region1: #{gcn_forward.1} parent=0
    #allocation2 [shape = 'u8[8192]{0}', space=vmem, size = 0x2000, scoped, tag = 'input window, operand 2, single buffered']
    #allocation3 [shape = 's32[1]{0}', space=sflag, size = 0x4, scoped, tag = 'scoped memory for gcn_forward.1']
    #allocation4 [shape = 's32[1]{0}', space=sflag, size = 0x4, scoped, tag = 'scoped memory for gcn_forward.1']
    #allocation5 [shape = 'u8[512]{0}', space=vmem, size = 0x400, scoped, tag = 'input window, operand 3, single buffered']
    #allocation6 [shape = 's32[1]{0}', space=sflag, size = 0x4, scoped, tag = 'scoped memory for gcn_forward.1']
    #allocation7 [shape = 'u8[512]{0}', space=vmem, size = 0x400, scoped, tag = 'input window, operand 4, single buffered']
    #allocation8 [shape = 'u8[512]{0}', space=vmem, size = 0x400, scoped, tag = 'input window, operand 6, single buffered']
    #allocation9 [shape = 's32[1]{0}', space=sflag, size = 0x4, scoped, tag = 'scoped memory for gcn_forward.1']
    #allocation10 [shape = 'u8[512]{0}', space=vmem, size = 0x400, scoped, tag = 'input window, operand 7, single buffered']
    #allocation11 [shape = 'u8[512]{0}', space=vmem, size = 0x400, scoped, tag = 'input window, operand 9, single buffered']
    #allocation12 [shape = 's32[1]{0}', space=sflag, size = 0x4, scoped, tag = 'scoped memory for gcn_forward.1']
    #allocation13 [shape = 'u8[512]{0}', space=vmem, size = 0x400, scoped, tag = 'input window, operand 12, single buffered']
    #allocation14 [shape = 'u8[1024]{0}', space=vmem, size = 0x400, scoped, tag = 'output window, operand 0, single buffered']
    %18 = vsyncpa [#allocation3], 0
    %19 = vsyncpa [#allocation6], 0
    %20 = vsyncpa [#allocation9], 0
    %21 = vsyncpa [#allocation12], 0
    %22 = vsyncpa [#allocation4], 0
    // Predicated region
    $region2: #{gcn_forward.1} parent=1 // pred_check
      _
    $region3: #{gcn_forward.1} parent=1 // pred_check_branch
      %24 = sbr.rel (0) target = $region5
    $region4: #{gcn_forward.1} parent=1 // pred_region
      _
    $region5: #{gcn_forward.1} parent=1 // pred_fallthru
      _
    // Predicated region
    $region6: #{gcn_forward.1} parent=1 // pred_check
      _
    $region7: #{gcn_forward.1} parent=1 // pred_check_branch
      %26 = sbr.rel (0) target = $region9
    $region8: #{gcn_forward.1} parent=1 // pred_region
      _
    $region9: #{gcn_forward.1} parent=1 // pred_fallthru
      _
    // Predicated region
    $region10: #{gcn_forward.1} parent=1 // pred_check
      _
    $region11: #{gcn_forward.1} parent=1 // pred_check_branch
      %28 = sbr.rel (0) target = $region13
    $region12: #{gcn_forward.1} parent=1 // pred_region
      %s30 = ssub.s32 256, 256
      %31 = vsyncadd [#allocation3], %s30
      %s32 = sshll.u32 [#allocation2], 4
      %s33 = int_to_ptr.vmem [resolvable:$true] %s32
      %38 = dma.hbm_to_vmem [thread:$0]  %s2, 256, %s33, [#allocation3], 128, 128, 8
    $region13: #{gcn_forward.1} parent=1 // pred_fallthru
      _
    // Predicated region
    $region14: #{gcn_forward.1} parent=1 // pred_check
      _
    $region15: #{gcn_forward.1} parent=1 // pred_check_branch
      %40 = sbr.rel (0) target = $region17
    $region16: #{gcn_forward.1} parent=1 // pred_region
      %s42 = ssub.s32 16, 16
      %43 = vsyncadd [#allocation6], %s42
      %s45 = sshll.u32 [#allocation5], 4
      %s46 = int_to_ptr.vmem [resolvable:$true] %s45
      %48 = dma.hbm_to_vmem [thread:$0]  %s3, 16, %s46, [#allocation6]
    $region17: #{gcn_forward.1} parent=1 // pred_fallthru
      _
    // Predicated region
    $region18: #{gcn_forward.1} parent=1 // pred_check
      _
    $region19: #{gcn_forward.1} parent=1 // pred_check_branch
      %50 = sbr.rel (0) target = $region21
    $region20: #{gcn_forward.1} parent=1 // pred_region
      %s52 = ssub.s32 16, 16
      %53 = vsyncadd [#allocation6], %s52
      %s55 = sshll.u32 [#allocation7], 4
      %s56 = int_to_ptr.vmem [resolvable:$true] %s55
      %58 = dma.hbm_to_vmem [thread:$0]  %s4, 16, %s56, [#allocation6]
    $region21: #{gcn_forward.1} parent=1 // pred_fallthru
      _
    // Predicated region
    $region22: #{gcn_forward.1} parent=1 // pred_check
      _
    $region23: #{gcn_forward.1} parent=1 // pred_check_branch
      %60 = sbr.rel (0) target = $region25
    $region24: #{gcn_forward.1} parent=1 // pred_region
      _
    $region25: #{gcn_forward.1} parent=1 // pred_fallthru
      _
    // Predicated region
    $region26: #{gcn_forward.1} parent=1 // pred_check
      _
    $region27: #{gcn_forward.1} parent=1 // pred_check_branch
      %62 = sbr.rel (0) target = $region29
    $region28: #{gcn_forward.1} parent=1 // pred_region
      %s64 = ssub.s32 16, 16
      %65 = vsyncadd [#allocation9], %s64
      %s67 = sshll.u32 [#allocation8], 4
      %s68 = int_to_ptr.vmem [resolvable:$true] %s67
      %70 = dma.hbm_to_vmem [thread:$0]  %s6, 16, %s68, [#allocation9]
    $region29: #{gcn_forward.1} parent=1 // pred_fallthru
      _
    // Predicated region
    $region30: #{gcn_forward.1} parent=1 // pred_check
      _
    $region31: #{gcn_forward.1} parent=1 // pred_check_branch
      %72 = sbr.rel (0) target = $region33
    $region32: #{gcn_forward.1} parent=1 // pred_region
      %s74 = ssub.s32 16, 16
      %75 = vsyncadd [#allocation9], %s74
      %s77 = sshll.u32 [#allocation10], 4
      %s78 = int_to_ptr.vmem [resolvable:$true] %s77
      %80 = dma.hbm_to_vmem [thread:$0]  %s7, 16, %s78, [#allocation9]
    $region33: #{gcn_forward.1} parent=1 // pred_fallthru
      _
    // Predicated region
    $region34: #{gcn_forward.1} parent=1 // pred_check
      _
    $region35: #{gcn_forward.1} parent=1 // pred_check_branch
      %82 = sbr.rel (0) target = $region37
    $region36: #{gcn_forward.1} parent=1 // pred_region
      _
    $region37: #{gcn_forward.1} parent=1 // pred_fallthru
      _
    // Predicated region
    $region38: #{gcn_forward.1} parent=1 // pred_check
      _
    $region39: #{gcn_forward.1} parent=1 // pred_check_branch
      %84 = sbr.rel (0) target = $region41
    $region40: #{gcn_forward.1} parent=1 // pred_region
      %s86 = ssub.s32 16, 16
      %87 = vsyncadd [#allocation12], %s86
      %s89 = sshll.u32 [#allocation11], 4
      %s90 = int_to_ptr.vmem [resolvable:$true] %s89
      %92 = dma.hbm_to_vmem [thread:$0]  %s9, 16, %s90, [#allocation12]
    $region41: #{gcn_forward.1} parent=1 // pred_fallthru
      _
    // Predicated region
    $region42: #{gcn_forward.1} parent=1 // pred_check
      _
    $region43: #{gcn_forward.1} parent=1 // pred_check_branch
      %94 = sbr.rel (0) target = $region45
    $region44: #{gcn_forward.1} parent=1 // pred_region
      _
    $region45: #{gcn_forward.1} parent=1 // pred_fallthru
      _
    // Predicated region
    $region46: #{gcn_forward.1} parent=1 // pred_check
      _
    $region47: #{gcn_forward.1} parent=1 // pred_check_branch
      %96 = sbr.rel (0) target = $region49
    $region48: #{gcn_forward.1} parent=1 // pred_region
      _
    $region49: #{gcn_forward.1} parent=1 // pred_fallthru
      _
    // Predicated region
    $region50: #{gcn_forward.1} parent=1 // pred_check
      _
    $region51: #{gcn_forward.1} parent=1 // pred_check_branch
      %98 = sbr.rel (0) target = $region53
    $region52: #{gcn_forward.1} parent=1 // pred_region
      %s100 = ssub.s32 16, 16
      %101 = vsyncadd [#allocation12], %s100
      %s103 = sshll.u32 [#allocation13], 4
      %s104 = int_to_ptr.vmem [resolvable:$true] %s103
      %106 = dma.hbm_to_vmem [thread:$0]  %s12, 16, %s104, [#allocation12]
    $region53: #{gcn_forward.1} parent=1 // pred_fallthru
      _
    // Predicated region
    $region54: #{gcn_forward.1} parent=1 // pred_check
      _
    $region55: #{gcn_forward.1} parent=1 // pred_check_branch
      %108 = sbr.rel (0) target = $region57
    $region56: #{gcn_forward.1} parent=1 // pred_region
      %109 = dma.done [#allocation3], 256
    $region57: #{gcn_forward.1} parent=1 // pred_fallthru
      _
    // Predicated region
    $region58: #{gcn_forward.1} parent=1 // pred_check
      _
    $region59: #{gcn_forward.1} parent=1 // pred_check_branch
      %111 = sbr.rel (0) target = $region61
    $region60: #{gcn_forward.1} parent=1 // pred_region
      %112 = dma.done [#allocation6], 16
    $region61: #{gcn_forward.1} parent=1 // pred_fallthru
      _
    // Predicated region
    $region62: #{gcn_forward.1} parent=1 // pred_check
      _
    $region63: #{gcn_forward.1} parent=1 // pred_check_branch
      %114 = sbr.rel (0) target = $region65
    $region64: #{gcn_forward.1} parent=1 // pred_region
      %115 = dma.done [#allocation6], 16
    $region65: #{gcn_forward.1} parent=1 // pred_fallthru
      _
    // Predicated region
    $region66: #{gcn_forward.1} parent=1 // pred_check
      _
    $region67: #{gcn_forward.1} parent=1 // pred_check_branch
      %117 = sbr.rel (0) target = $region69
    $region68: #{gcn_forward.1} parent=1 // pred_region
      %118 = dma.done [#allocation9], 16
    $region69: #{gcn_forward.1} parent=1 // pred_fallthru
      _
    // Predicated region
    $region70: #{gcn_forward.1} parent=1 // pred_check
      _
    $region71: #{gcn_forward.1} parent=1 // pred_check_branch
      %120 = sbr.rel (0) target = $region73
    $region72: #{gcn_forward.1} parent=1 // pred_region
      %121 = dma.done [#allocation9], 16
    $region73: #{gcn_forward.1} parent=1 // pred_fallthru
      _
    // Predicated region
    $region74: #{gcn_forward.1} parent=1 // pred_check
      _
    $region75: #{gcn_forward.1} parent=1 // pred_check_branch
      %123 = sbr.rel (0) target = $region77
    $region76: #{gcn_forward.1} parent=1 // pred_region
      %124 = dma.done [#allocation12], 16
    $region77: #{gcn_forward.1} parent=1 // pred_fallthru
      _
    // Predicated region
    $region78: #{gcn_forward.1} parent=1 // pred_check
      _
    $region79: #{gcn_forward.1} parent=1 // pred_check_branch
      %126 = sbr.rel (0) target = $region81
    $region80: #{gcn_forward.1} parent=1 // pred_region
      %127 = dma.done [#allocation12], 16
    $region81: #{gcn_forward.1} parent=1 // pred_fallthru
      _
    %v128 = vld [vmem:[%s0] sm:$0xff]
    %v129 = vld [vmem:[%s0 + $0x8] sm:$0xff]
    %v130 = vld [vmem:[%s0 + $0x10] sm:$0xff]
    %v131 = vld [vmem:[%s0 + $0x18] sm:$0xff]
    %v132 = vld [vmem:[%s1] sm:$0xff]
    %v133 = vld [vmem:[%s1 + $0x8] sm:$0xff]
    %v134 = vld [vmem:[%s1 + $0x10] sm:$0xff]
    %v135 = vld [vmem:[%s1 + $0x18] sm:$0xff]
    %v136 = vld [vmem:[#allocation2] sm:$0xff]
    %v137 = vld [vmem:[#allocation2 + $0x8] sm:$0xff]
    %v138 = vld [vmem:[#allocation5] sm:$0x1]
    %v139 = vld [vmem:[#allocation7] sm:$0x1]
    %vm140 = vcmask 130048
    %v142 = vsel %vm140, %v132, 0
    %v145 = vsel %vm140, %v133, 0
    %v148 = vsel %vm140, %v134, 0
    %v151 = vsel %vm140, %v135, 0
    %153 = vmatprep.subr.mxu0 0.0
    %154 = vmatpush1.msra.mxu0 %v136
    %155 = vmatprep.subr.mxu0 0.0
    %156 = vmatpush1.msra.mxu0 %v137
    %157 = vmatprep.subr.mxu0 0.0
    %158 = vmatpush1.msra.mxu0 0.0
    %159 = vmatprep.subr.mxu0 0.0
    %160 = vmatpush1.msra.mxu0 0.0
    %161 = vmatprep.subr.mxu0 0.0
    %162 = vmatpush1.msra.mxu0 0.0
    %163 = vmatprep.subr.mxu0 0.0
    %164 = vmatpush1.msra.mxu0 0.0
    %165 = vmatprep.subr.mxu0 0.0
    %166 = vmatpush1.msra.mxu0 0.0
    %167 = vmatprep.subr.mxu0 0.0
    %168 = vmatpush1.msra.mxu0 0.0
    %169 = vmatprep.subr.mxu0 0.0
    %170 = vmatpush1.msra.mxu0 0.0
    %171 = vmatprep.subr.mxu0 0.0
    %172 = vmatpush1.msra.mxu0 0.0
    %173 = vmatprep.subr.mxu0 0.0
    %174 = vmatpush1.msra.mxu0 0.0
    %175 = vmatprep.subr.mxu0 0.0
    %176 = vmatpush1.msra.mxu0 0.0
    %177 = vmatprep.subr.mxu0 0.0
    %178 = vmatpush1.msra.mxu0 0.0
    %179 = vmatprep.subr.mxu0 0.0
    %180 = vmatpush1.msra.mxu0 0.0
    %181 = vmatprep.subr.mxu0 0.0
    %182 = vmatpush1.msra.mxu0 0.0
    %183 = vmatprep.subr.mxu0 0.0
    %184 = vmatpush1.msra.mxu0 0.0
    %185 = vmatprep.subr.mxu0 0.0
    %186 = vmatpush1.msra.mxu0 0.0
    %187 = vmatprep.subr.mxu0 0.0
    %188 = vmatpush1.msra.mxu0 0.0
    %189 = vmatprep.subr.mxu0 0.0
    %190 = vmatpush1.msra.mxu0 0.0
    %191 = vmatprep.subr.mxu0 0.0
    %192 = vmatpush1.msra.mxu0 0.0
    %193 = vmatprep.subr.mxu0 0.0
    %194 = vmatpush1.msra.mxu0 0.0
    %195 = vmatprep.subr.mxu0 0.0
    %196 = vmatpush1.msra.mxu0 0.0
    %197 = vmatprep.subr.mxu0 0.0
    %198 = vmatpush1.msra.mxu0 0.0
    %199 = vmatprep.subr.mxu0 0.0
    %200 = vmatpush1.msra.mxu0 0.0
    %201 = vmatprep.subr.mxu0 0.0
    %202 = vmatpush1.msra.mxu0 0.0
    %203 = vmatprep.subr.mxu0 0.0
    %204 = vmatpush1.msra.mxu0 0.0
    %205 = vmatprep.subr.mxu0 0.0
    %206 = vmatpush1.msra.mxu0 0.0
    %207 = vmatprep.subr.mxu0 0.0
    %208 = vmatpush1.msra.mxu0 0.0
    %209 = vmatprep.subr.mxu0 0.0
    %210 = vmatpush1.msra.mxu0 0.0
    %211 = vmatprep.subr.mxu0 0.0
    %212 = vmatpush1.msra.mxu0 0.0
    %213 = vmatprep.subr.mxu0 0.0
    %214 = vmatpush1.msra.mxu0 0.0
    %215 = vmatprep.subr.mxu0 0.0
    %216 = vmatpush1.msra.mxu0 0.0
    %217 = vmatprep.mubr.f32.mxu0 0.0
    %218 = vmatmul.mubr.f32.gmra.mrb[0].mxu0 %v142
    %v219 = vpop.f32.mrb[0].mxu0
    %v220 = vadd.f32 0.0, %v219
    %v221 = vpop.f32.mrb[0].mxu0
    %222 = vmatprep.mubr.f32.mxu0 0.0
    %223 = vmatmul.mubr.f32.gmra.mrb[0].mxu0 %v145
    %v224 = vpop.f32.mrb[0].mxu0
    %v225 = vadd.f32 0.0, %v224
    %v226 = vpop.f32.mrb[0].mxu0
    %227 = vmatprep.mubr.f32.mxu0 0.0
    %228 = vmatmul.mubr.f32.gmra.mrb[0].mxu0 %v148
    %v229 = vpop.f32.mrb[0].mxu0
    %v230 = vadd.f32 0.0, %v229
    %v231 = vpop.f32.mrb[0].mxu0
    %232 = vmatprep.mubr.f32.mxu0 0.0
    %233 = vmatmul.mubr.f32.gmra.mrb[0].mxu0 %v151
    %v234 = vpop.f32.mrb[0].mxu0
    %v235 = vadd.f32 0.0, %v234
    %v236 = vpop.f32.mrb[0].mxu0
    %237 = vdwg.mxu0
    %vm238 = vcmask 261120
    %v240 = vsel %vm238, %v128, 0
    %v243 = vsel %vm238, %v129, 0
    %v246 = vsel %vm238, %v130, 0
    %v249 = vsel %vm238, %v131, 0
    %251 = vmatprep.subr.mxu0 0.0
    %252 = vmatpush1.msra.mxu0 %v220
    %253 = vmatprep.subr.mxu0 0.0
    %254 = vmatpush1.msra.mxu0 %v225
    %255 = vmatprep.subr.mxu0 0.0
    %256 = vmatpush1.msra.mxu0 %v230
    %257 = vmatprep.subr.mxu0 0.0
    %258 = vmatpush1.msra.mxu0 %v235
    %259 = vmatprep.subr.mxu0 0.0
    %260 = vmatpush1.msra.mxu0 0.0
    %261 = vmatprep.subr.mxu0 0.0
    %262 = vmatpush1.msra.mxu0 0.0
    %263 = vmatprep.subr.mxu0 0.0
    %264 = vmatpush1.msra.mxu0 0.0
    %265 = vmatprep.subr.mxu0 0.0
    %266 = vmatpush1.msra.mxu0 0.0
    %267 = vmatprep.subr.mxu0 0.0
    %268 = vmatpush1.msra.mxu0 0.0
    %269 = vmatprep.subr.mxu0 0.0
    %270 = vmatpush1.msra.mxu0 0.0
    %271 = vmatprep.subr.mxu0 0.0
    %272 = vmatpush1.msra.mxu0 0.0
    %273 = vmatprep.subr.mxu0 0.0
    %274 = vmatpush1.msra.mxu0 0.0
    %275 = vmatprep.subr.mxu0 0.0
    %276 = vmatpush1.msra.mxu0 0.0
    %277 = vmatprep.subr.mxu0 0.0
    %278 = vmatpush1.msra.mxu0 0.0
    %279 = vmatprep.subr.mxu0 0.0
    %280 = vmatpush1.msra.mxu0 0.0
    %281 = vmatprep.subr.mxu0 0.0
    %282 = vmatpush1.msra.mxu0 0.0
    %283 = vmatprep.subr.mxu0 0.0
    %284 = vmatpush1.msra.mxu0 0.0
    %285 = vmatprep.subr.mxu0 0.0
    %286 = vmatpush1.msra.mxu0 0.0
    %287 = vmatprep.subr.mxu0 0.0
    %288 = vmatpush1.msra.mxu0 0.0
    %289 = vmatprep.subr.mxu0 0.0
    %290 = vmatpush1.msra.mxu0 0.0
    %291 = vmatprep.subr.mxu0 0.0
    %292 = vmatpush1.msra.mxu0 0.0
    %293 = vmatprep.subr.mxu0 0.0
    %294 = vmatpush1.msra.mxu0 0.0
    %295 = vmatprep.subr.mxu0 0.0
    %296 = vmatpush1.msra.mxu0 0.0
    %297 = vmatprep.subr.mxu0 0.0
    %298 = vmatpush1.msra.mxu0 0.0
    %299 = vmatprep.subr.mxu0 0.0
    %300 = vmatpush1.msra.mxu0 0.0
    %301 = vmatprep.subr.mxu0 0.0
    %302 = vmatpush1.msra.mxu0 0.0
    %303 = vmatprep.subr.mxu0 0.0
    %304 = vmatpush1.msra.mxu0 0.0
    %305 = vmatprep.subr.mxu0 0.0
    %306 = vmatpush1.msra.mxu0 0.0
    %307 = vmatprep.subr.mxu0 0.0
    %308 = vmatpush1.msra.mxu0 0.0
    %309 = vmatprep.subr.mxu0 0.0
    %310 = vmatpush1.msra.mxu0 0.0
    %311 = vmatprep.subr.mxu0 0.0
    %312 = vmatpush1.msra.mxu0 0.0
    %313 = vmatprep.subr.mxu0 0.0
    %314 = vmatpush1.msra.mxu0 0.0
    %315 = vmatprep.mubr.f32.mxu0 0.0
    %316 = vmatmul.mubr.f32.gmra.mrb[0].mxu0 %v240
    %v317 = vpop.f32.mrb[0].mxu0
    %v318 = vadd.f32 0.0, %v317
    %v319 = vpop.f32.mrb[0].mxu0
    %320 = vmatprep.mubr.f32.mxu0 0.0
    %321 = vmatmul.mubr.f32.gmra.mrb[0].mxu0 %v243
    %v322 = vpop.f32.mrb[0].mxu0
    %v323 = vadd.f32 0.0, %v322
    %v324 = vpop.f32.mrb[0].mxu0
    %325 = vmatprep.mubr.f32.mxu0 0.0
    %326 = vmatmul.mubr.f32.gmra.mrb[0].mxu0 %v246
    %v327 = vpop.f32.mrb[0].mxu0
    %v328 = vadd.f32 0.0, %v327
    %v329 = vpop.f32.mrb[0].mxu0
    %330 = vmatprep.mubr.f32.mxu0 0.0
    %331 = vmatmul.mubr.f32.gmra.mrb[0].mxu0 %v249
    %v332 = vpop.f32.mrb[0].mxu0
    %v333 = vadd.f32 0.0, %v332
    %v334 = vpop.f32.mrb[0].mxu0
    %335 = vdwg.mxu0
    %v337 = vlaneseq
    %v338 = vshrl.u32 %v337, 7
    %v339 = vsub.s32 0, %v338
    %v340 = vrot.slane %v138, %v339
    %v342 = vmul.f32 %v318, %v340
    %v343 = vmul.f32 %v323, %v340
    %v344 = vmul.f32 %v328, %v340
    %v345 = vmul.f32 %v333, %v340
    %v347 = vlaneseq
    %v348 = vshrl.u32 %v347, 7
    %v349 = vsub.s32 0, %v348
    %v350 = vrot.slane %v139, %v349
    %v352 = vadd.f32 %v342, %v350
    %v353 = vadd.f32 %v343, %v350
    %v354 = vadd.f32 %v344, %v350
    %v355 = vadd.f32 %v345, %v350
    %v356 = vmax.f32 %v352, 0.0
    %v357 = vmax.f32 %v353, 0.0
    %v358 = vmax.f32 %v354, 0.0
    %v359 = vmax.f32 %v355, 0.0
    %v360 = vld [vmem:[%s5] sm:$0xff]
    %v361 = vld [vmem:[%s5 + $0x8] sm:$0xff]
    %v362 = vld [vmem:[%s5 + $0x10] sm:$0xff]
    %v363 = vld [vmem:[%s5 + $0x18] sm:$0xff]
    %v364 = vld [vmem:[#allocation8] sm:$0x1]
    %v365 = vld [vmem:[#allocation10] sm:$0x1]
    %v367 = vsel %vm238, %v356, 0
    %v370 = vsel %vm238, %v357, 0
    %v373 = vsel %vm238, %v358, 0
    %v376 = vsel %vm238, %v359, 0
    %378 = vmatprep.subr.mxu0 0.0
    %379 = vmatpush1.msra.mxu0 %v360
    %380 = vmatprep.subr.mxu0 0.0
    %381 = vmatpush1.msra.mxu0 %v361
    %382 = vmatprep.subr.mxu0 0.0
    %383 = vmatpush1.msra.mxu0 %v362
    %384 = vmatprep.subr.mxu0 0.0
    %385 = vmatpush1.msra.mxu0 %v363
    %386 = vmatprep.subr.mxu0 0.0
    %387 = vmatpush1.msra.mxu0 0.0
    %388 = vmatprep.subr.mxu0 0.0
    %389 = vmatpush1.msra.mxu0 0.0
    %390 = vmatprep.subr.mxu0 0.0
    %391 = vmatpush1.msra.mxu0 0.0
    %392 = vmatprep.subr.mxu0 0.0
    %393 = vmatpush1.msra.mxu0 0.0
    %394 = vmatprep.subr.mxu0 0.0
    %395 = vmatpush1.msra.mxu0 0.0
    %396 = vmatprep.subr.mxu0 0.0
    %397 = vmatpush1.msra.mxu0 0.0
    %398 = vmatprep.subr.mxu0 0.0
    %399 = vmatpush1.msra.mxu0 0.0
    %400 = vmatprep.subr.mxu0 0.0
    %401 = vmatpush1.msra.mxu0 0.0
    %402 = vmatprep.subr.mxu0 0.0
    %403 = vmatpush1.msra.mxu0 0.0
    %404 = vmatprep.subr.mxu0 0.0
    %405 = vmatpush1.msra.mxu0 0.0
    %406 = vmatprep.subr.mxu0 0.0
    %407 = vmatpush1.msra.mxu0 0.0
    %408 = vmatprep.subr.mxu0 0.0
    %409 = vmatpush1.msra.mxu0 0.0
    %410 = vmatprep.subr.mxu0 0.0
    %411 = vmatpush1.msra.mxu0 0.0
    %412 = vmatprep.subr.mxu0 0.0
    %413 = vmatpush1.msra.mxu0 0.0
    %414 = vmatprep.subr.mxu0 0.0
    %415 = vmatpush1.msra.mxu0 0.0
    %416 = vmatprep.subr.mxu0 0.0
    %417 = vmatpush1.msra.mxu0 0.0
    %418 = vmatprep.subr.mxu0 0.0
    %419 = vmatpush1.msra.mxu0 0.0
    %420 = vmatprep.subr.mxu0 0.0
    %421 = vmatpush1.msra.mxu0 0.0
    %422 = vmatprep.subr.mxu0 0.0
    %423 = vmatpush1.msra.mxu0 0.0
    %424 = vmatprep.subr.mxu0 0.0
    %425 = vmatpush1.msra.mxu0 0.0
    %426 = vmatprep.subr.mxu0 0.0
    %427 = vmatpush1.msra.mxu0 0.0
    %428 = vmatprep.subr.mxu0 0.0
    %429 = vmatpush1.msra.mxu0 0.0
    %430 = vmatprep.subr.mxu0 0.0
    %431 = vmatpush1.msra.mxu0 0.0
    %432 = vmatprep.subr.mxu0 0.0
    %433 = vmatpush1.msra.mxu0 0.0
    %434 = vmatprep.subr.mxu0 0.0
    %435 = vmatpush1.msra.mxu0 0.0
    %436 = vmatprep.subr.mxu0 0.0
    %437 = vmatpush1.msra.mxu0 0.0
    %438 = vmatprep.subr.mxu0 0.0
    %439 = vmatpush1.msra.mxu0 0.0
    %440 = vmatprep.subr.mxu0 0.0
    %441 = vmatpush1.msra.mxu0 0.0
    %442 = vmatprep.mubr.f32.mxu0 0.0
    %443 = vmatmul.mubr.f32.gmra.mrb[0].mxu0 %v367
    %v444 = vpop.f32.mrb[0].mxu0
    %v445 = vadd.f32 0.0, %v444
    %v446 = vpop.f32.mrb[0].mxu0
    %447 = vmatprep.mubr.f32.mxu0 0.0
    %448 = vmatmul.mubr.f32.gmra.mrb[0].mxu0 %v370
    %v449 = vpop.f32.mrb[0].mxu0
    %v450 = vadd.f32 0.0, %v449
    %v451 = vpop.f32.mrb[0].mxu0
    %452 = vmatprep.mubr.f32.mxu0 0.0
    %453 = vmatmul.mubr.f32.gmra.mrb[0].mxu0 %v373
    %v454 = vpop.f32.mrb[0].mxu0
    %v455 = vadd.f32 0.0, %v454
    %v456 = vpop.f32.mrb[0].mxu0
    %457 = vmatprep.mubr.f32.mxu0 0.0
    %458 = vmatmul.mubr.f32.gmra.mrb[0].mxu0 %v376
    %v459 = vpop.f32.mrb[0].mxu0
    %v460 = vadd.f32 0.0, %v459
    %v461 = vpop.f32.mrb[0].mxu0
    %462 = vdwg.mxu0
    %463 = vmatprep.subr.mxu0 0.0
    %464 = vmatpush1.msra.mxu0 %v445
    %465 = vmatprep.subr.mxu0 0.0
    %466 = vmatpush1.msra.mxu0 %v450
    %467 = vmatprep.subr.mxu0 0.0
    %468 = vmatpush1.msra.mxu0 %v455
    %469 = vmatprep.subr.mxu0 0.0
    %470 = vmatpush1.msra.mxu0 %v460
    %471 = vmatprep.subr.mxu0 0.0
    %472 = vmatpush1.msra.mxu0 0.0
    %473 = vmatprep.subr.mxu0 0.0
    %474 = vmatpush1.msra.mxu0 0.0
    %475 = vmatprep.subr.mxu0 0.0
    %476 = vmatpush1.msra.mxu0 0.0
    %477 = vmatprep.subr.mxu0 0.0
    %478 = vmatpush1.msra.mxu0 0.0
    %479 = vmatprep.subr.mxu0 0.0
    %480 = vmatpush1.msra.mxu0 0.0
    %481 = vmatprep.subr.mxu0 0.0
    %482 = vmatpush1.msra.mxu0 0.0
    %483 = vmatprep.subr.mxu0 0.0
    %484 = vmatpush1.msra.mxu0 0.0
    %485 = vmatprep.subr.mxu0 0.0
    %486 = vmatpush1.msra.mxu0 0.0
    %487 = vmatprep.subr.mxu0 0.0
    %488 = vmatpush1.msra.mxu0 0.0
    %489 = vmatprep.subr.mxu0 0.0
    %490 = vmatpush1.msra.mxu0 0.0
    %491 = vmatprep.subr.mxu0 0.0
    %492 = vmatpush1.msra.mxu0 0.0
    %493 = vmatprep.subr.mxu0 0.0
    %494 = vmatpush1.msra.mxu0 0.0
    %495 = vmatprep.subr.mxu0 0.0
    %496 = vmatpush1.msra.mxu0 0.0
    %497 = vmatprep.subr.mxu0 0.0
    %498 = vmatpush1.msra.mxu0 0.0
    %499 = vmatprep.subr.mxu0 0.0
    %500 = vmatpush1.msra.mxu0 0.0
    %501 = vmatprep.subr.mxu0 0.0
    %502 = vmatpush1.msra.mxu0 0.0
    %503 = vmatprep.subr.mxu0 0.0
    %504 = vmatpush1.msra.mxu0 0.0
    %505 = vmatprep.subr.mxu0 0.0
    %506 = vmatpush1.msra.mxu0 0.0
    %507 = vmatprep.subr.mxu0 0.0
    %508 = vmatpush1.msra.mxu0 0.0
    %509 = vmatprep.subr.mxu0 0.0
    %510 = vmatpush1.msra.mxu0 0.0
    %511 = vmatprep.subr.mxu0 0.0
    %512 = vmatpush1.msra.mxu0 0.0
    %513 = vmatprep.subr.mxu0 0.0
    %514 = vmatpush1.msra.mxu0 0.0
    %515 = vmatprep.subr.mxu0 0.0
    %516 = vmatpush1.msra.mxu0 0.0
    %517 = vmatprep.subr.mxu0 0.0
    %518 = vmatpush1.msra.mxu0 0.0
    %519 = vmatprep.subr.mxu0 0.0
    %520 = vmatpush1.msra.mxu0 0.0
    %521 = vmatprep.subr.mxu0 0.0
    %522 = vmatpush1.msra.mxu0 0.0
    %523 = vmatprep.subr.mxu0 0.0
    %524 = vmatpush1.msra.mxu0 0.0
    %525 = vmatprep.subr.mxu0 0.0
    %526 = vmatpush1.msra.mxu0 0.0
    %527 = vmatprep.mubr.f32.mxu0 0.0
    %528 = vmatmul.mubr.f32.gmra.mrb[0].mxu0 %v240
    %v529 = vpop.f32.mrb[0].mxu0
    %v530 = vadd.f32 0.0, %v529
    %v531 = vpop.f32.mrb[0].mxu0
    %532 = vmatprep.mubr.f32.mxu0 0.0
    %533 = vmatmul.mubr.f32.gmra.mrb[0].mxu0 %v243
    %v534 = vpop.f32.mrb[0].mxu0
    %v535 = vadd.f32 0.0, %v534
    %v536 = vpop.f32.mrb[0].mxu0
    %537 = vmatprep.mubr.f32.mxu0 0.0
    %538 = vmatmul.mubr.f32.gmra.mrb[0].mxu0 %v246
    %v539 = vpop.f32.mrb[0].mxu0
    %v540 = vadd.f32 0.0, %v539
    %v541 = vpop.f32.mrb[0].mxu0
    %542 = vmatprep.mubr.f32.mxu0 0.0
    %543 = vmatmul.mubr.f32.gmra.mrb[0].mxu0 %v249
    %v544 = vpop.f32.mrb[0].mxu0
    %v545 = vadd.f32 0.0, %v544
    %v546 = vpop.f32.mrb[0].mxu0
    %547 = vdwg.mxu0
    %v549 = vlaneseq
    %v550 = vshrl.u32 %v549, 7
    %v551 = vsub.s32 0, %v550
    %v552 = vrot.slane %v364, %v551
    %v554 = vmul.f32 %v530, %v552
    %v555 = vmul.f32 %v535, %v552
    %v556 = vmul.f32 %v540, %v552
    %v557 = vmul.f32 %v545, %v552
    %v559 = vlaneseq
    %v560 = vshrl.u32 %v559, 7
    %v561 = vsub.s32 0, %v560
    %v562 = vrot.slane %v365, %v561
    %v564 = vadd.f32 %v554, %v562
    %v565 = vadd.f32 %v555, %v562
    %v566 = vadd.f32 %v556, %v562
    %v567 = vadd.f32 %v557, %v562
    %v568 = vmax.f32 %v564, 0.0
    %v569 = vmax.f32 %v565, 0.0
    %v570 = vmax.f32 %v566, 0.0
    %v571 = vmax.f32 %v567, 0.0
    %v572 = vld [vmem:[%s8] sm:$0xff]
    %v573 = vld [vmem:[%s8 + $0x8] sm:$0xff]
    %v574 = vld [vmem:[%s8 + $0x10] sm:$0xff]
    %v575 = vld [vmem:[%s8 + $0x18] sm:$0xff]
    %v577 = vsel %vm238, %v568, 0
    %v580 = vsel %vm238, %v569, 0
    %v583 = vsel %vm238, %v570, 0
    %v586 = vsel %vm238, %v571, 0
    %588 = vmatprep.subr.mxu0 0.0
    %589 = vmatpush1.msra.mxu0 %v572
    %590 = vmatprep.subr.mxu0 0.0
    %591 = vmatpush1.msra.mxu0 %v573
    %592 = vmatprep.subr.mxu0 0.0
    %593 = vmatpush1.msra.mxu0 %v574
    %594 = vmatprep.subr.mxu0 0.0
    %595 = vmatpush1.msra.mxu0 %v575
    %596 = vmatprep.subr.mxu0 0.0
    %597 = vmatpush1.msra.mxu0 0.0
    %598 = vmatprep.subr.mxu0 0.0
    %599 = vmatpush1.msra.mxu0 0.0
    %600 = vmatprep.subr.mxu0 0.0
    %601 = vmatpush1.msra.mxu0 0.0
    %602 = vmatprep.subr.mxu0 0.0
    %603 = vmatpush1.msra.mxu0 0.0
    %604 = vmatprep.subr.mxu0 0.0
    %605 = vmatpush1.msra.mxu0 0.0
    %606 = vmatprep.subr.mxu0 0.0
    %607 = vmatpush1.msra.mxu0 0.0
    %608 = vmatprep.subr.mxu0 0.0
    %609 = vmatpush1.msra.mxu0 0.0
    %610 = vmatprep.subr.mxu0 0.0
    %611 = vmatpush1.msra.mxu0 0.0
    %612 = vmatprep.subr.mxu0 0.0
    %613 = vmatpush1.msra.mxu0 0.0
    %614 = vmatprep.subr.mxu0 0.0
    %615 = vmatpush1.msra.mxu0 0.0
    %616 = vmatprep.subr.mxu0 0.0
    %617 = vmatpush1.msra.mxu0 0.0
    %618 = vmatprep.subr.mxu0 0.0
    %619 = vmatpush1.msra.mxu0 0.0
    %620 = vmatprep.subr.mxu0 0.0
    %621 = vmatpush1.msra.mxu0 0.0
    %622 = vmatprep.subr.mxu0 0.0
    %623 = vmatpush1.msra.mxu0 0.0
    %624 = vmatprep.subr.mxu0 0.0
    %625 = vmatpush1.msra.mxu0 0.0
    %626 = vmatprep.subr.mxu0 0.0
    %627 = vmatpush1.msra.mxu0 0.0
    %628 = vmatprep.subr.mxu0 0.0
    %629 = vmatpush1.msra.mxu0 0.0
    %630 = vmatprep.subr.mxu0 0.0
    %631 = vmatpush1.msra.mxu0 0.0
    %632 = vmatprep.subr.mxu0 0.0
    %633 = vmatpush1.msra.mxu0 0.0
    %634 = vmatprep.subr.mxu0 0.0
    %635 = vmatpush1.msra.mxu0 0.0
    %636 = vmatprep.subr.mxu0 0.0
    %637 = vmatpush1.msra.mxu0 0.0
    %638 = vmatprep.subr.mxu0 0.0
    %639 = vmatpush1.msra.mxu0 0.0
    %640 = vmatprep.subr.mxu0 0.0
    %641 = vmatpush1.msra.mxu0 0.0
    %642 = vmatprep.subr.mxu0 0.0
    %643 = vmatpush1.msra.mxu0 0.0
    %644 = vmatprep.subr.mxu0 0.0
    %645 = vmatpush1.msra.mxu0 0.0
    %646 = vmatprep.subr.mxu0 0.0
    %647 = vmatpush1.msra.mxu0 0.0
    %648 = vmatprep.subr.mxu0 0.0
    %649 = vmatpush1.msra.mxu0 0.0
    %650 = vmatprep.subr.mxu0 0.0
    %651 = vmatpush1.msra.mxu0 0.0
    %652 = vmatprep.mubr.f32.mxu0 0.0
    %653 = vmatmul.mubr.f32.gmra.mrb[0].mxu0 %v577
    %v654 = vpop.f32.mrb[0].mxu0
    %v655 = vadd.f32 0.0, %v654
    %v656 = vpop.f32.mrb[0].mxu0
    %657 = vmatprep.mubr.f32.mxu0 0.0
    %658 = vmatmul.mubr.f32.gmra.mrb[0].mxu0 %v580
    %v659 = vpop.f32.mrb[0].mxu0
    %v660 = vadd.f32 0.0, %v659
    %v661 = vpop.f32.mrb[0].mxu0
    %662 = vmatprep.mubr.f32.mxu0 0.0
    %663 = vmatmul.mubr.f32.gmra.mrb[0].mxu0 %v583
    %v664 = vpop.f32.mrb[0].mxu0
    %v665 = vadd.f32 0.0, %v664
    %v666 = vpop.f32.mrb[0].mxu0
    %667 = vmatprep.mubr.f32.mxu0 0.0
    %668 = vmatmul.mubr.f32.gmra.mrb[0].mxu0 %v586
    %v669 = vpop.f32.mrb[0].mxu0
    %v670 = vadd.f32 0.0, %v669
    %v671 = vpop.f32.mrb[0].mxu0
    %672 = vdwg.mxu0
    %v673 = vld [vmem:[#allocation11] sm:$0x1]
    %v675 = vlaneseq
    %v676 = vshrl.u32 %v675, 7
    %v677 = vsub.s32 0, %v676
    %v678 = vrot.slane %v673, %v677
    %680 = vmatprep.subr.mxu0 0.0
    %681 = vmatpush1.msra.mxu0 %v655
    %682 = vmatprep.subr.mxu0 0.0
    %683 = vmatpush1.msra.mxu0 %v660
    %684 = vmatprep.subr.mxu0 0.0
    %685 = vmatpush1.msra.mxu0 %v665
    %686 = vmatprep.subr.mxu0 0.0
    %687 = vmatpush1.msra.mxu0 %v670
    %688 = vmatprep.subr.mxu0 0.0
    %689 = vmatpush1.msra.mxu0 0.0
    %690 = vmatprep.subr.mxu0 0.0
    %691 = vmatpush1.msra.mxu0 0.0
    %692 = vmatprep.subr.mxu0 0.0
    %693 = vmatpush1.msra.mxu0 0.0
    %694 = vmatprep.subr.mxu0 0.0
    %695 = vmatpush1.msra.mxu0 0.0
    %696 = vmatprep.subr.mxu0 0.0
    %697 = vmatpush1.msra.mxu0 0.0
    %698 = vmatprep.subr.mxu0 0.0
    %699 = vmatpush1.msra.mxu0 0.0
    %700 = vmatprep.subr.mxu0 0.0
    %701 = vmatpush1.msra.mxu0 0.0
    %702 = vmatprep.subr.mxu0 0.0
    %703 = vmatpush1.msra.mxu0 0.0
    %704 = vmatprep.subr.mxu0 0.0
    %705 = vmatpush1.msra.mxu0 0.0
    %706 = vmatprep.subr.mxu0 0.0
    %707 = vmatpush1.msra.mxu0 0.0
    %708 = vmatprep.subr.mxu0 0.0
    %709 = vmatpush1.msra.mxu0 0.0
    %710 = vmatprep.subr.mxu0 0.0
    %711 = vmatpush1.msra.mxu0 0.0
    %712 = vmatprep.subr.mxu0 0.0
    %713 = vmatpush1.msra.mxu0 0.0
    %714 = vmatprep.subr.mxu0 0.0
    %715 = vmatpush1.msra.mxu0 0.0
    %716 = vmatprep.subr.mxu0 0.0
    %717 = vmatpush1.msra.mxu0 0.0
    %718 = vmatprep.subr.mxu0 0.0
    %719 = vmatpush1.msra.mxu0 0.0
    %720 = vmatprep.subr.mxu0 0.0
    %721 = vmatpush1.msra.mxu0 0.0
    %722 = vmatprep.subr.mxu0 0.0
    %723 = vmatpush1.msra.mxu0 0.0
    %724 = vmatprep.subr.mxu0 0.0
    %725 = vmatpush1.msra.mxu0 0.0
    %726 = vmatprep.subr.mxu0 0.0
    %727 = vmatpush1.msra.mxu0 0.0
    %728 = vmatprep.subr.mxu0 0.0
    %729 = vmatpush1.msra.mxu0 0.0
    %730 = vmatprep.subr.mxu0 0.0
    %731 = vmatpush1.msra.mxu0 0.0
    %732 = vmatprep.subr.mxu0 0.0
    %733 = vmatpush1.msra.mxu0 0.0
    %734 = vmatprep.subr.mxu0 0.0
    %735 = vmatpush1.msra.mxu0 0.0
    %736 = vmatprep.subr.mxu0 0.0
    %737 = vmatpush1.msra.mxu0 0.0
    %738 = vmatprep.subr.mxu0 0.0
    %739 = vmatpush1.msra.mxu0 0.0
    %740 = vmatprep.subr.mxu0 0.0
    %741 = vmatpush1.msra.mxu0 0.0
    %742 = vmatprep.subr.mxu0 0.0
    %743 = vmatpush1.msra.mxu0 0.0
    %744 = vmatprep.mubr.f32.mxu0 0.0
    %745 = vmatmul.mubr.f32.gmra.mrb[0].mxu0 %v240
    %v746 = vpop.f32.mrb[0].mxu0
    %v747 = vadd.f32 %v678, %v746
    %v748 = vpop.f32.mrb[0].mxu0
    %749 = vmatprep.mubr.f32.mxu0 0.0
    %750 = vmatmul.mubr.f32.gmra.mrb[0].mxu0 %v243
    %v751 = vpop.f32.mrb[0].mxu0
    %v752 = vadd.f32 %v678, %v751
    %v753 = vpop.f32.mrb[0].mxu0
    %754 = vmatprep.mubr.f32.mxu0 0.0
    %755 = vmatmul.mubr.f32.gmra.mrb[0].mxu0 %v246
    %v756 = vpop.f32.mrb[0].mxu0
    %v757 = vadd.f32 %v678, %v756
    %v758 = vpop.f32.mrb[0].mxu0
    %759 = vmatprep.mubr.f32.mxu0 0.0
    %760 = vmatmul.mubr.f32.gmra.mrb[0].mxu0 %v249
    %v761 = vpop.f32.mrb[0].mxu0
    %v762 = vadd.f32 %v678, %v761
    %v763 = vpop.f32.mrb[0].mxu0
    %764 = vdwg.mxu0
    %v765 = vld [vmem:[%s10] sm:$0x3]
    %v766 = vsub.f32 %v765, 1.0
    %v767 = vmul.f32 %v766, 1e+30
    %v768 = vlaneseq
    %v769 = vshrl.u32 %v768, 7
    %v770 = vsub.s32 0, %v769
    %v771 = vrot.slane %v767, %v770
    %773 = vbcast.lane.b32.xlu0 %v771, 256
    %v774 = vpop.permute.xlu0 %773
    %s776 = sor.u32 256, 8
    %777 = vbcast.lane.b32.xlu0 %v771, %s776
    %v778 = vpop.permute.xlu0 %777
    %s780 = sor.u32 256, 16
    %781 = vbcast.lane.b32.xlu0 %v771, %s780
    %v782 = vpop.permute.xlu0 %781
    %s784 = sor.u32 256, 24
    %785 = vbcast.lane.b32.xlu0 %v771, %s784
    %v786 = vpop.permute.xlu0 %785
    %v787 = vlaneseq
    %v788 = vshrl.u32 %v787, 7
    %v789 = vsub.s32 1, %v788
    %v790 = vrot.slane %v767, %v789
    %792 = vbcast.lane.b32.xlu0 %v790, 256
    %v793 = vpop.permute.xlu0 %792
    %s795 = sor.u32 256, 8
    %796 = vbcast.lane.b32.xlu0 %v790, %s795
    %v797 = vpop.permute.xlu0 %796
    %s799 = sor.u32 256, 16
    %800 = vbcast.lane.b32.xlu0 %v790, %s799
    %v801 = vpop.permute.xlu0 %800
    %s803 = sor.u32 256, 24
    %804 = vbcast.lane.b32.xlu0 %v790, %s803
    %v805 = vpop.permute.xlu0 %804
    %v806 = vadd.f32 %v747, %v774
    %v807 = vadd.f32 %v752, %v778
    %v808 = vadd.f32 %v757, %v782
    %v809 = vadd.f32 %v762, %v786
    %v810 = vadd.f32 %v747, %v793
    %v811 = vadd.f32 %v752, %v797
    %v812 = vadd.f32 %v757, %v801
    %v813 = vadd.f32 %v762, %v805
    %v814 = vsel %vm238, %v806, -inf
    %v815 = vsel %vm238, %v807, -inf
    %v816 = vsel %vm238, %v808, -inf
    %v817 = vmax.f32 %v814, %v816
    %v818 = vsel %vm238, %v809, -inf
    %v819 = vmax.f32 %v815, %v818
    %v820 = vmax.f32 %v817, %v819
    %v821 = vrot.slane %v820, 4
    %v822 = vmax.f32 %v820, %v821
    %v823 = vrot.slane %v822, 2
    %v824 = vmax.f32 %v822, %v823
    %v825 = vrot.slane %v824, 1
    %v826 = vmax.f32 %v824, %v825
    %v827 = vsel %vm238, %v810, -inf
    %v828 = vsel %vm238, %v811, -inf
    %v829 = vsel %vm238, %v812, -inf
    %v830 = vmax.f32 %v827, %v829
    %v831 = vsel %vm238, %v813, -inf
    %v832 = vmax.f32 %v828, %v831
    %v833 = vmax.f32 %v830, %v832
    %v834 = vrot.slane %v833, 4
    %v835 = vmax.f32 %v833, %v834
    %v836 = vrot.slane %v835, 2
    %v837 = vmax.f32 %v835, %v836
    %v838 = vrot.slane %v837, 1
    %v839 = vmax.f32 %v837, %v838
    %v840 = vld [vmem:[%s11] sm:$0xff]
    %v841 = vld [vmem:[%s11 + $0x8] sm:$0xff]
    %v842 = vld [vmem:[%s11 + $0x10] sm:$0xff]
    %v843 = vld [vmem:[%s11 + $0x18] sm:$0xff]
    %v844 = vld [vmem:[#allocation13] sm:$0x1]
    %v846 = vlaneseq
    %v847 = vshrl.u32 %v846, 7
    %v848 = vsub.s32 0, %v847
    %v849 = vrot.slane %v844, %v848
    %vm853 = vcmask 1041409
    %v854 = vsel %vm853, %v839, %v826
    %v855 = vsel %vm238, %v854, 0
    %857 = vmatprep.subr.mxu0 0.0
    %858 = vmatpush1.msra.mxu0 %v840
    %859 = vmatprep.subr.mxu0 0.0
    %860 = vmatpush1.msra.mxu0 %v841
    %861 = vmatprep.subr.mxu0 0.0
    %862 = vmatpush1.msra.mxu0 %v842
    %863 = vmatprep.subr.mxu0 0.0
    %864 = vmatpush1.msra.mxu0 %v843
    %865 = vmatprep.subr.mxu0 0.0
    %866 = vmatpush1.msra.mxu0 0.0
    %867 = vmatprep.subr.mxu0 0.0
    %868 = vmatpush1.msra.mxu0 0.0
    %869 = vmatprep.subr.mxu0 0.0
    %870 = vmatpush1.msra.mxu0 0.0
    %871 = vmatprep.subr.mxu0 0.0
    %872 = vmatpush1.msra.mxu0 0.0
    %873 = vmatprep.subr.mxu0 0.0
    %874 = vmatpush1.msra.mxu0 0.0
    %875 = vmatprep.subr.mxu0 0.0
    %876 = vmatpush1.msra.mxu0 0.0
    %877 = vmatprep.subr.mxu0 0.0
    %878 = vmatpush1.msra.mxu0 0.0
    %879 = vmatprep.subr.mxu0 0.0
    %880 = vmatpush1.msra.mxu0 0.0
    %881 = vmatprep.subr.mxu0 0.0
    %882 = vmatpush1.msra.mxu0 0.0
    %883 = vmatprep.subr.mxu0 0.0
    %884 = vmatpush1.msra.mxu0 0.0
    %885 = vmatprep.subr.mxu0 0.0
    %886 = vmatpush1.msra.mxu0 0.0
    %887 = vmatprep.subr.mxu0 0.0
    %888 = vmatpush1.msra.mxu0 0.0
    %889 = vmatprep.subr.mxu0 0.0
    %890 = vmatpush1.msra.mxu0 0.0
    %891 = vmatprep.subr.mxu0 0.0
    %892 = vmatpush1.msra.mxu0 0.0
    %893 = vmatprep.subr.mxu0 0.0
    %894 = vmatpush1.msra.mxu0 0.0
    %895 = vmatprep.subr.mxu0 0.0
    %896 = vmatpush1.msra.mxu0 0.0
    %897 = vmatprep.subr.mxu0 0.0
    %898 = vmatpush1.msra.mxu0 0.0
    %899 = vmatprep.subr.mxu0 0.0
    %900 = vmatpush1.msra.mxu0 0.0
    %901 = vmatprep.subr.mxu0 0.0
    %902 = vmatpush1.msra.mxu0 0.0
    %903 = vmatprep.subr.mxu0 0.0
    %904 = vmatpush1.msra.mxu0 0.0
    %905 = vmatprep.subr.mxu0 0.0
    %906 = vmatpush1.msra.mxu0 0.0
    %907 = vmatprep.subr.mxu0 0.0
    %908 = vmatpush1.msra.mxu0 0.0
    %909 = vmatprep.subr.mxu0 0.0
    %910 = vmatpush1.msra.mxu0 0.0
    %911 = vmatprep.subr.mxu0 0.0
    %912 = vmatpush1.msra.mxu0 0.0
    %913 = vmatprep.subr.mxu0 0.0
    %914 = vmatpush1.msra.mxu0 0.0
    %915 = vmatprep.subr.mxu0 0.0
    %916 = vmatpush1.msra.mxu0 0.0
    %917 = vmatprep.subr.mxu0 0.0
    %918 = vmatpush1.msra.mxu0 0.0
    %919 = vmatprep.subr.mxu0 0.0
    %920 = vmatpush1.msra.mxu0 0.0
    %921 = vmatprep.mubr.f32.mxu0 0.0
    %922 = vmatmul.mubr.f32.gmra.mrb[0].mxu0 %v855
    %v923 = vpop.f32.mrb[0].mxu0
    %v924 = vadd.f32 %v849, %v923
    %v925 = vpop.f32.mrb[0].mxu0
    %926 = vdwg.mxu0
    %vm927 = vcmask 25600
    %v928 = vsel %vm927, %v924, -inf
    %929 = vmax.xlane.f32.xlu0 %v928
    %v930 = vpop.xlane.xlu0 %929
    %v931 = vsub.f32 %v924, %v930
    %v932 = vmul.f32 %v931, 1.442695
    %v933 = vpow.pop %v932
    %v934 = vsel %vm927, %v933, 0.0
    %935 = vadd.xlane.f32.xlu0 %v934
    %v936 = vpop.xlane.xlu0 %935
    %v937 = vlog2.pop %v936
    %v938 = vmul.f32 %v937, 0.6931472
    %v939 = vsub.f32 %v931, %v938
    %940 = vst.msk [vmem:[#allocation14] sm:$0x3] %vm927, %v939
    // Predicated region
    $region82: #{gcn_forward.1} parent=1 // pred_check
      _
    $region83: #{gcn_forward.1} parent=1 // pred_check_branch
      %942 = sbr.rel (0) target = $region85
    $region84: #{gcn_forward.1} parent=1 // pred_region
      %s944 = ssub.s32 32, 32
      %945 = vsyncadd [#allocation4], %s944
      %s947 = sshll.u32 [#allocation14], 4
      %s948 = int_to_ptr.vmem [resolvable:$true] %s947
      %950 = dma.vmem_to_hbm [thread:$0]  %s948, 32, %s13, [#allocation4]
    $region85: #{gcn_forward.1} parent=1 // pred_fallthru
      _
    // Predicated region
    $region86: #{gcn_forward.1} parent=1 // pred_check
      _
    $region87: #{gcn_forward.1} parent=1 // pred_check_branch
      %952 = sbr.rel (0) target = $region89
    $region88: #{gcn_forward.1} parent=1 // pred_region
      %953 = dma.done [#allocation4], 32
    $region89: #{gcn_forward.1} parent=1 // pred_fallthru
      _
    %954 = vsyncpa [#allocation3], 1
    %955 = vsyncpa [#allocation6], 1
    %956 = vsyncpa [#allocation9], 1
    %957 = vsyncpa [#allocation12], 1
    %958 = vsyncpa [#allocation4], 1

</llo_original>
